<compile_context>
chip_gen: v7x
topology: tpu7x:2x2x1
jax: 0.10.0
libtpu: 0.0.40
codegen_flags: <defaults>
</compile_context>

<pallas_src>
import functools

import jax
import jax.numpy as jnp
from jax.experimental import pallas as pl
from jax.experimental.pallas import tpu as pltpu


def _weak_annotation_kernel(x_ref, sel_ref, o_ref):
    # x_ref:   (B_TILE, H*W)  — B_TILE flattened images
    # sel_ref: (H*W, ph*pw)   — resident 0/1 patch selector
    # o_ref:   (B_TILE, ph*pw)
    x = x_ref[...].astype(jnp.float32)
    s = jnp.dot(x, sel_ref[...], preferred_element_type=jnp.float32)  # (B_TILE, k)
    m = jnp.max(s, axis=-1, keepdims=True)                            # per-image max
    # Exact reciprocal (approx=True would violate the 1e-5 tolerance).
    # NOTE: an all-zero image yields max==0 -> NaN, same as the PyTorch ref.
    o_ref[...] = s * pl.reciprocal(m, approx=False)


def _round_up(n, m):
    return ((n + m - 1) // m) * m


def _make_selector(patch_size, img_size):
    """(H*W, ph*pw) f32 selector: pixel (r, c) -> patch (r//ps)*pw + (c//ps)."""
    ph = pw = img_size // patch_size
    idx = jnp.arange(img_size * img_size, dtype=jnp.int32)
    rows = idx // img_size
    cols = idx % img_size
    patch_id = (rows // patch_size) * pw + (cols // patch_size)       # (H*W,)
    k = ph * pw
    sel = (patch_id[:, None] == jnp.arange(k, dtype=jnp.int32)[None, :])
    return sel.astype(jnp.float32)


def weak_annotation(x, patch_size=4, img_size=16, b_tile=512):
    """Pallas TPU implementation of the weak_annotation module, batched.

    x: (N, H, W) or (N, 1, H, W) float array. Each image is processed
       independently (summed per patch, normalized by its own max),
       exactly matching the PyTorch module applied per (1, H, W) image.
    Returns (N, (img_size // patch_size) ** 2) float32.
    """
    assert img_size % patch_size == 0, "patch_size must divide img_size"
    if x.ndim == 4:
        assert x.shape[1] == 1, "module is defined for c=1"
        x = x[:, 0]
    N, H, W = x.shape
    assert H == img_size and W == img_size
    ph = pw = img_size // patch_size
    k = ph * pw
    hw = H * W

    # Free row-major flatten to a lane-dense (N, H*W) layout.
    x2d = x.reshape(N, hw)

    # Pick tile: multiple of 8 sublanes, capped so double-buffered input
    # stays small even on v7x's 64 MiB VMEM; pad N up to a tile multiple.
    bt = min(b_tile, max(8, _round_up(N, 8)))
    bt = _round_up(bt, 8)
    n_pad = _round_up(N, bt)
    if n_pad != N:
        x2d = jnp.pad(x2d, ((0, n_pad - N), (0, 0)))

    sel = _make_selector(patch_size, img_size)                        # (H*W, k)

    out = pl.pallas_call(
        _weak_annotation_kernel,
        out_shape=jax.ShapeDtypeStruct((n_pad, k), jnp.float32),
        grid=(n_pad // bt,),
        in_specs=[
            pl.BlockSpec((bt, hw), lambda i: (i, 0)),
            pl.BlockSpec((hw, k), lambda i: (0, 0)),  # resident constant block
        ],
        out_specs=pl.BlockSpec((bt, k), lambda i: (i, 0)),
        compiler_params=pltpu.CompilerParams(
            dimension_semantics=("parallel",)),
    )(x2d, sel)

    return out[:N]


def weak_annotation_ref(x, patch_size=4, img_size=16):
    # Pure-JAX reference of the PyTorch forward, applied per image.
    if x.ndim == 4:
        x = x[:, 0]
    N = x.shape[0]
    ph = pw = img_size // patch_size
    xr = x.reshape(N, ph, patch_size, pw, patch_size)
    xr = jnp.transpose(xr, (0, 1, 3, 2, 4)).reshape(
        N, ph * pw, patch_size, patch_size)
    s = jnp.sum(xr, axis=(-2, -1)).astype(jnp.float32)
    return s / jnp.max(s, axis=-1, keepdims=True)


if __name__ == "__main__":
    patch_size = 4
    img_size = 16
    n_images = 4

    key = jax.random.PRNGKey(0)
    # Batch of single-channel images; the module's forward is per (1, H, W).
    x = jax.random.uniform(
        key, (n_images, 1, img_size, img_size), dtype=jnp.float32)

    out = jax.block_until_ready(weak_annotation(x, patch_size, img_size))
    ref = weak_annotation_ref(x, patch_size, img_size)
    assert out.shape == (n_images, (img_size // patch_size) ** 2)
    assert jnp.allclose(out, ref, atol=1e-5, rtol=1e-5)

    # N=1 reproduces the original module's (c=1, H, W) -> (1, ph*pw) behaviour.
    out1 = jax.block_until_ready(weak_annotation(x[:1], patch_size, img_size))
    assert jnp.allclose(out1, ref[:1], atol=1e-5, rtol=1e-5)

    print("KERNEL_OK")
</pallas_src>

<mosaic_0001>
module attributes {stable_mosaic.version = 11 : i64} {
  func.func @_weak_annotation_kernel(%arg0: i32, %arg1: memref<8x256xf32, #tpu.memory_space<vmem>>, %arg2: memref<256x16xf32, #tpu.memory_space<vmem>>, %arg3: memref<8x16xf32, #tpu.memory_space<vmem>>) attributes {dimension_semantics = [#tpu.dimension_semantics<parallel>], iteration_bounds = array<i64: 1>, scalar_prefetch = 0 : i64, scratch_operands = 0 : i64, tpu.core_type = #tpu.core_type<tc>, window_params = [{transform_indices = @transform_0, window_bounds = array<i64: 8, 256>}, {pipeline_mode = #tpu.pipeline_mode<synchronous>, transform_indices = @transform_1, window_bounds = array<i64: 256, 16>}, {transform_indices = @transform_2, window_bounds = array<i64: 8, 16>}]} {
    %c0 = arith.constant 0 : index
    %c0_0 = arith.constant 0 : index
    %0 = vector.load %arg1[%c0, %c0_0] : memref<8x256xf32, #tpu.memory_space<vmem>>, vector<8x256xf32>
    %c0_1 = arith.constant 0 : index
    %c0_2 = arith.constant 0 : index
    %1 = vector.load %arg2[%c0_1, %c0_2] : memref<256x16xf32, #tpu.memory_space<vmem>>, vector<256x16xf32>
    %cst = arith.constant dense<0.000000e+00> : vector<8x16xf32>
    %2 = tpu.matmul %0, %1, %cst {dimension_numbers = #tpu.dot_dimension_numbers<[1], [0], [0], [1], [0, 0, 1, 1], [], []>} : vector<8x256xf32>, vector<256x16xf32>, vector<8x16xf32> -> vector<8x16xf32>
    %cst_3 = arith.constant dense<0xFF800000> : vector<8xf32>
    %3 = vector.multi_reduction <maximumf>, %2, %cst_3 [1] : vector<8x16xf32> to vector<8xf32>
    %4 = vector.shape_cast %3 : vector<8xf32> to vector<8x1xf32>
    %5 = tpu.reciprocal %4 : vector<8x1xf32> -> vector<8x1xf32>
    %6 = vector.broadcast %5 : vector<8x1xf32> to vector<8x16xf32>
    %7 = arith.mulf %2, %6 : vector<8x16xf32>
    %c0_4 = arith.constant 0 : index
    %c0_5 = arith.constant 0 : index
    %8 = vector.load %arg3[%c0_4, %c0_5] : memref<8x16xf32, #tpu.memory_space<vmem>>, vector<8x16xf32>
    tpu.vector_store %arg3[%c0_4, %c0_5], %7 {strides = array<i32>} : memref<8x16xf32, #tpu.memory_space<vmem>>, vector<8x16xf32>,
    return
  }
  func.func @transform_0(%arg0: i32) -> (i32, i32) {
    %c0_i32 = arith.constant 0 : i32
    %c0_i32_0 = arith.constant 0 : i32
    return %arg0, %c0_i32 : i32, i32
  }
  func.func @transform_1(%arg0: i32) -> (i32, i32) {
    %c0_i32 = arith.constant 0 : i32
    %c0_i32_0 = arith.constant 0 : i32
    %c0_i32_1 = arith.constant 0 : i32
    return %c0_i32, %c0_i32_0 : i32, i32
  }
  func.func @transform_2(%arg0: i32) -> (i32, i32) {
    %c0_i32 = arith.constant 0 : i32
    %c0_i32_0 = arith.constant 0 : i32
    return %arg0, %c0_i32 : i32, i32
  }
}

</mosaic_0001>

<llo_original>
// kernel: tpu_custom_call.1
$region0: #{tpu_custom_call.1}
  #allocation0 [shape = 'u32[]', space=smem, size = 0x4, offset = 0x4, fixed_abs, tag = 'smem constant byte address 0x4 - core index']
  #allocation1 [shape = 'u32[144,128]{1,0:T(1,128)}', space=vmem, size = 0x12000, scoped, tag = 'internal scratch']
  %s0 = inlined_call_operand.vmem [shape: f32[8,256], index: 0, kind: input, shape index: {}]
  %s1 = inlined_call_operand.vmem [shape: f32[256,16], index: 1, kind: input, shape index: {}]
  %s2 = inlined_call_operand.hbm [shape: f32[8,16], index: 2, kind: output, shape index: {}]
  %s3 = sld [smem:[#allocation0]]
  $region18: #{tpu_custom_call.1} parent=0
    _
  %s5 = ssub.s32 1, %s3
  %s6 = scalar_select 0, %s5, %s3
  $region1: #{tpu_custom_call.1} parent=0
    #allocation2 [shape = 'u8[4096]{0}', space=vmem, size = 0x1000, scoped, tag = 'output window, operand 0, single buffered']
    #allocation3 [shape = 's32[1]{0}', space=sflag, size = 0x4, scoped, tag = 'scoped memory for tpu_custom_call.1']
    %7 = vsyncpa [#allocation3], 0
    // Predicated region
    $region2: #{tpu_custom_call.1} parent=1 // pred_check
      _
    $region3: #{tpu_custom_call.1} parent=1 // pred_check_branch
      %9 = sbr.rel (0) target = $region5
    $region4: #{tpu_custom_call.1} parent=1 // pred_region
      _
    $region5: #{tpu_custom_call.1} parent=1 // pred_fallthru
      _
    // Predicated region
    $region6: #{tpu_custom_call.1} parent=1 // pred_check
      _
    $region7: #{tpu_custom_call.1} parent=1 // pred_check_branch
      %11 = sbr.rel (0) target = $region9
    $region8: #{tpu_custom_call.1} parent=1 // pred_region
      _
    $region9: #{tpu_custom_call.1} parent=1 // pred_fallthru
      _
    %v12 = vld [vmem:[%s0] sm:$0xff]
    %v13 = vld [vmem:[%s0 + $0x8] sm:$0xff]
    %v14 = vld [vmem:[%s1] sm:$0xff]
    %v15 = vld [vmem:[%s1 + $0x8] sm:$0xff]
    %v16 = vld [vmem:[%s1 + $0x10] sm:$0xff]
    %v17 = vld [vmem:[%s1 + $0x18] sm:$0xff]
    %v18 = vld [vmem:[%s1 + $0x20] sm:$0xff]
    %v19 = vld [vmem:[%s1 + $0x28] sm:$0xff]
    %v20 = vld [vmem:[%s1 + $0x30] sm:$0xff]
    %v21 = vld [vmem:[%s1 + $0x38] sm:$0xff]
    %v22 = vld [vmem:[%s1 + $0x40] sm:$0xff]
    %v23 = vld [vmem:[%s1 + $0x48] sm:$0xff]
    %v24 = vld [vmem:[%s1 + $0x50] sm:$0xff]
    %v25 = vld [vmem:[%s1 + $0x58] sm:$0xff]
    %v26 = vld [vmem:[%s1 + $0x60] sm:$0xff]
    %v27 = vld [vmem:[%s1 + $0x68] sm:$0xff]
    %v28 = vld [vmem:[%s1 + $0x70] sm:$0xff]
    %v29 = vld [vmem:[%s1 + $0x78] sm:$0xff]
    %v30 = vld [vmem:[%s1 + $0x80] sm:$0xff]
    %v31 = vld [vmem:[%s1 + $0x88] sm:$0xff]
    %v32 = vld [vmem:[%s1 + $0x90] sm:$0xff]
    %v33 = vld [vmem:[%s1 + $0x98] sm:$0xff]
    %v34 = vld [vmem:[%s1 + $0xa0] sm:$0xff]
    %v35 = vld [vmem:[%s1 + $0xa8] sm:$0xff]
    %v36 = vld [vmem:[%s1 + $0xb0] sm:$0xff]
    %v37 = vld [vmem:[%s1 + $0xb8] sm:$0xff]
    %v38 = vld [vmem:[%s1 + $0xc0] sm:$0xff]
    %v39 = vld [vmem:[%s1 + $0xc8] sm:$0xff]
    %v40 = vld [vmem:[%s1 + $0xd0] sm:$0xff]
    %v41 = vld [vmem:[%s1 + $0xd8] sm:$0xff]
    %v42 = vld [vmem:[%s1 + $0xe0] sm:$0xff]
    %v43 = vld [vmem:[%s1 + $0xe8] sm:$0xff]
    %v44 = vld [vmem:[%s1 + $0xf0] sm:$0xff]
    %v45 = vld [vmem:[%s1 + $0xf8] sm:$0xff]
    %46 = vmatprep.subr.mxu0 0.0
    %47 = vmatpush1.msra.mxu0 %v14
    %48 = vmatprep.subr.mxu0 0.0
    %49 = vmatpush1.msra.mxu0 %v15
    %50 = vmatprep.subr.mxu0 0.0
    %51 = vmatpush1.msra.mxu0 %v16
    %52 = vmatprep.subr.mxu0 0.0
    %53 = vmatpush1.msra.mxu0 %v17
    %54 = vmatprep.subr.mxu0 0.0
    %55 = vmatpush1.msra.mxu0 %v18
    %56 = vmatprep.subr.mxu0 0.0
    %57 = vmatpush1.msra.mxu0 %v19
    %58 = vmatprep.subr.mxu0 0.0
    %59 = vmatpush1.msra.mxu0 %v20
    %60 = vmatprep.subr.mxu0 0.0
    %61 = vmatpush1.msra.mxu0 %v21
    %62 = vmatprep.subr.mxu0 0.0
    %63 = vmatpush1.msra.mxu0 %v22
    %64 = vmatprep.subr.mxu0 0.0
    %65 = vmatpush1.msra.mxu0 %v23
    %66 = vmatprep.subr.mxu0 0.0
    %67 = vmatpush1.msra.mxu0 %v24
    %68 = vmatprep.subr.mxu0 0.0
    %69 = vmatpush1.msra.mxu0 %v25
    %70 = vmatprep.subr.mxu0 0.0
    %71 = vmatpush1.msra.mxu0 %v26
    %72 = vmatprep.subr.mxu0 0.0
    %73 = vmatpush1.msra.mxu0 %v27
    %74 = vmatprep.subr.mxu0 0.0
    %75 = vmatpush1.msra.mxu0 %v28
    %76 = vmatprep.subr.mxu0 0.0
    %77 = vmatpush1.msra.mxu0 %v29
    %78 = vmatprep.subr.mxu0 0.0
    %79 = vmatpush1.msra.mxu0 %v30
    %80 = vmatprep.subr.mxu0 0.0
    %81 = vmatpush1.msra.mxu0 %v31
    %82 = vmatprep.subr.mxu0 0.0
    %83 = vmatpush1.msra.mxu0 %v32
    %84 = vmatprep.subr.mxu0 0.0
    %85 = vmatpush1.msra.mxu0 %v33
    %86 = vmatprep.subr.mxu0 0.0
    %87 = vmatpush1.msra.mxu0 %v34
    %88 = vmatprep.subr.mxu0 0.0
    %89 = vmatpush1.msra.mxu0 %v35
    %90 = vmatprep.subr.mxu0 0.0
    %91 = vmatpush1.msra.mxu0 %v36
    %92 = vmatprep.subr.mxu0 0.0
    %93 = vmatpush1.msra.mxu0 %v37
    %94 = vmatprep.subr.mxu0 0.0
    %95 = vmatpush1.msra.mxu0 %v38
    %96 = vmatprep.subr.mxu0 0.0
    %97 = vmatpush1.msra.mxu0 %v39
    %98 = vmatprep.subr.mxu0 0.0
    %99 = vmatpush1.msra.mxu0 %v40
    %100 = vmatprep.subr.mxu0 0.0
    %101 = vmatpush1.msra.mxu0 %v41
    %102 = vmatprep.subr.mxu0 0.0
    %103 = vmatpush1.msra.mxu0 %v42
    %104 = vmatprep.subr.mxu0 0.0
    %105 = vmatpush1.msra.mxu0 %v43
    %106 = vmatprep.subr.mxu0 0.0
    %107 = vmatpush1.msra.mxu0 %v44
    %108 = vmatprep.subr.mxu0 0.0
    %109 = vmatpush1.msra.mxu0 %v45
    %110 = vmatprep.mubr.f32.mxu0 %v13
    %111 = vmatmul.mubr.f32.gmra.mrb[0].mxu0 %v12
    %v112 = vpop.f32.mrb[0].mxu0
    %v113 = vadd.f32 0.0, %v112
    %v114 = vpop.f32.mrb[0].mxu0
    %115 = vdwg.mxu0
    %vm116 = vcmask 130048
    %v117 = vsel %vm116, %v113, -inf
    %118 = vmax.xlane.f32.xlu0 %v117
    %v119 = vpop.xlane.xlu0 %118
    %v120 = vrcp.pop %v119
    %v121 = vmul.f32 %v113, %v120
    %122 = vst.msk [vmem:[#allocation2] sm:$0xff] %vm116, %v121
    // Predicated region
    $region10: #{tpu_custom_call.1} parent=1 // pred_check
      _
    $region11: #{tpu_custom_call.1} parent=1 // pred_check_branch
      %124 = sbr.rel (0) target = $region13
    $region12: #{tpu_custom_call.1} parent=1 // pred_region
      %s126 = ssub.s32 128, 128
      %127 = vsyncadd [#allocation3], %s126
      %s129 = sshll.u32 [#allocation2], 4
      %s130 = int_to_ptr.vmem [resolvable:$true] %s129
      %132 = dma.vmem_to_hbm [thread:$0]  %s130, 128, %s2, [#allocation3]
    $region13: #{tpu_custom_call.1} parent=1 // pred_fallthru
      _
    // Predicated region
    $region14: #{tpu_custom_call.1} parent=1 // pred_check
      _
    $region15: #{tpu_custom_call.1} parent=1 // pred_check_branch
      %134 = sbr.rel (0) target = $region17
    $region16: #{tpu_custom_call.1} parent=1 // pred_region
      %135 = dma.done [#allocation3], 128
    $region17: #{tpu_custom_call.1} parent=1 // pred_fallthru
      _
    %136 = vsyncpa [#allocation3], 1

</llo_original>
